<compile_context>
chip_gen: v6e
topology: v6e:2x2x1
jax: 0.10.0
libtpu: 0.0.40
codegen_flags: <defaults>
</compile_context>

<pallas_src>
import functools

import jax
import jax.numpy as jnp
import numpy as np
from jax import lax
from jax.experimental import pallas as pl
from jax.experimental.pallas import tpu as pltpu

BN_EPS = 1e-5
LANE = 128
VMEM_LIMIT = 32 * 1024 * 1024


def _round_up(x, m):
    return ((x + m - 1) // m) * m


# ----------------------------------------------------------------------------
# Pallas kernels
# ----------------------------------------------------------------------------
def conv_stats_kernel(x_ref, w_ref, y_ref, stats_ref, acc_ref):
    """Tiled im2col-matmul conv + per-channel batch-statistics accumulation.

    grid = (Cout tiles [parallel], M tiles [arbitrary], K tiles [arbitrary]).
    x_ref : [TM, TK] bf16 patches     w_ref : [TK, TN] bf16 weights
    y_ref : [TM, TN] f32 conv output  stats_ref : [8, TN] f32
        row 0 = sum over M, row 1 = sum of squares, rows 2..7 unused padding.
    acc_ref : [TM, TN] f32 scratch accumulator over the K axis.
    """
    k = pl.program_id(2)

    @pl.when(k == 0)
    def _():
        acc_ref[...] = jnp.zeros_like(acc_ref)

    @pl.when(jnp.logical_and(pl.program_id(1) == 0, k == 0))
    def _():
        stats_ref[...] = jnp.zeros_like(stats_ref)

    acc_ref[...] += jnp.dot(x_ref[...], w_ref[...],
                            preferred_element_type=jnp.float32)

    @pl.when(k == pl.num_programs(2) - 1)
    def _():
        y = acc_ref[...]
        y_ref[...] = y
        tn = y.shape[1]
        upd = jnp.concatenate(
            [jnp.sum(y, axis=0, keepdims=True),
             jnp.sum(y * y, axis=0, keepdims=True),
             jnp.zeros((6, tn), jnp.float32)], axis=0)
        stats_ref[...] = stats_ref[...] + upd


def bn_act_kernel(y_ref, scale_ref, shift_ref, o_ref, *, relu):
    out = y_ref[...] * scale_ref[...] + shift_ref[...]
    if relu:
        out = jnp.maximum(out, 0.0)
    o_ref[...] = out


def se_gate_kernel(sq_ref, w1_ref, b1_ref, w2_ref, b2_ref, gate_ref):
    """Batched SE excite: gate = sigmoid(relu(sq@w1+b1)@w2+b2) for all N rows."""
    sq = sq_ref[...].astype(jnp.bfloat16)
    h = jnp.dot(sq, w1_ref[...].astype(jnp.bfloat16),
                preferred_element_type=jnp.float32) + b1_ref[...]
    h = jnp.maximum(h, 0.0)
    z = jnp.dot(h.astype(jnp.bfloat16), w2_ref[...].astype(jnp.bfloat16),
                preferred_element_type=jnp.float32) + b2_ref[...]
    gate_ref[...] = jax.nn.sigmoid(z)


def bn_se_res_kernel(y_ref, id_ref, gate_ref, scale_ref, shift_ref, o_ref):
    """Fused BN-apply + SE gating + residual add + ReLU for one sample."""
    bn = y_ref[0] * scale_ref[...] + shift_ref[...]          # [HW, Cp]
    o_ref[0] = jnp.maximum(bn * gate_ref[0] + id_ref[0], 0.0)


def linear_kernel(x_ref, w_ref, b_ref, o_ref):
    o_ref[...] = (jnp.dot(x_ref[...], w_ref[...],
                          preferred_element_type=jnp.float32) + b_ref[...])


# ----------------------------------------------------------------------------
# JAX-side glue (im2col, padding, pooling, wrappers)
# ----------------------------------------------------------------------------
def im2col(x, kh, kw, stride, pad):
    """x: [N,H,W,C] f32 -> bf16 patches [N*OH*OW, kh*kw*C] (tap-major layout)."""
    n, h, w, c = x.shape
    xp = jnp.pad(x, ((0, 0), (pad, pad), (pad, pad), (0, 0)))
    oh = (h + 2 * pad - kh) // stride + 1
    ow = (w + 2 * pad - kw) // stride + 1
    cols = []
    for i in range(kh):
        for j in range(kw):
            cols.append(xp[:, i:i + stride * oh:stride,
                           j:j + stride * ow:stride, :])
    patches = jnp.concatenate(cols, axis=-1).astype(jnp.bfloat16)
    return patches.reshape(n * oh * ow, kh * kw * c), oh, ow


def _pick_tk(k):
    kp0 = _round_up(k, LANE)
    if kp0 <= 1024:
        return kp0
    for t in (512, 384, 256, 128):
        if kp0 % t == 0:
            return t
    return 128


def conv_raw(x, w, stride, pad):
    """Bias-free conv on a (possibly channel-padded) NHWC activation.

    x : [N,H,W,Cact] f32 with Cact >= real Cin (extra channels are zero)
    w : [kh,kw,Cin,Cout] f32
    Returns (y_p [Mp, Cp] f32, stats [8, Cp] f32, M, OH, OW, Cp).
    """
    n = x.shape[0]
    kh, kw, cin, cout = w.shape
    assert x.shape[-1] >= cin
    cp = _round_up(cout, LANE)

    patches, oh, ow = im2col(x[..., :cin], kh, kw, stride, pad)
    m, k = patches.shape

    tm = min(256, _round_up(m, 8))
    tn = LANE if cp <= 2 * LANE else 2 * LANE
    tk = _pick_tk(k)
    mp = _round_up(m, tm)
    kp = _round_up(k, tk)

    patches_p = jnp.zeros((mp, kp), jnp.bfloat16).at[:m, :k].set(patches)
    w_col = jnp.zeros((kp, cp), jnp.float32)
    w_col = w_col.at[:k, :cout].set(w.reshape(k, cout)).astype(jnp.bfloat16)

    nj, nm, nk = cp // tn, mp // tm, kp // tk
    y_p, stats = pl.pallas_call(
        conv_stats_kernel,
        out_shape=(jax.ShapeDtypeStruct((mp, cp), jnp.float32),
                   jax.ShapeDtypeStruct((8, cp), jnp.float32)),
        grid=(nj, nm, nk),
        in_specs=[
            pl.BlockSpec((tm, tk), lambda j, i, l: (i, l)),
            pl.BlockSpec((tk, tn), lambda j, i, l: (l, j)),
        ],
        out_specs=(
            pl.BlockSpec((tm, tn), lambda j, i, l: (i, j)),
            pl.BlockSpec((8, tn), lambda j, i, l: (0, j)),
        ),
        scratch_shapes=[pltpu.VMEM((tm, tn), jnp.float32)],
        compiler_params=pltpu.CompilerParams(
            dimension_semantics=("parallel", "arbitrary", "arbitrary"),
            vmem_limit_bytes=VMEM_LIMIT),
    )(patches_p, w_col)
    return y_p, stats, m, oh, ow, cp


def bn_scale_shift(stats, gamma, beta, m_count, cp):
    """Per-channel affine (scale, shift) from the accumulated batch stats."""
    c = gamma.shape[0]
    g = jnp.zeros((cp,), jnp.float32).at[:c].set(gamma)
    b = jnp.zeros((cp,), jnp.float32).at[:c].set(beta)
    mean = stats[0] / m_count
    # TODO(synk): single-pass E[x^2]-mean^2 in f32; use Welford for very large M.
    var = jnp.maximum(stats[1] / m_count - mean * mean, 0.0)
    scale = g * lax.rsqrt(var + BN_EPS)
    shift = b - mean * scale
    return scale, shift


def bn_apply(y_p, scale, shift, relu):
    mp, cp = y_p.shape
    tm = min(256, mp)
    return pl.pallas_call(
        functools.partial(bn_act_kernel, relu=relu),
        out_shape=jax.ShapeDtypeStruct((mp, cp), jnp.float32),
        grid=(mp // tm,),
        in_specs=[
            pl.BlockSpec((tm, cp), lambda i: (i, 0)),
            pl.BlockSpec((1, cp), lambda i: (0, 0)),
            pl.BlockSpec((1, cp), lambda i: (0, 0)),
        ],
        out_specs=pl.BlockSpec((tm, cp), lambda i: (i, 0)),
        compiler_params=pltpu.CompilerParams(
            dimension_semantics=("parallel",),
            vmem_limit_bytes=VMEM_LIMIT),
    )(y_p, scale.reshape(1, cp), shift.reshape(1, cp))


def conv_bn_act(x, w, gamma, beta, stride, pad, relu):
    n = x.shape[0]
    y_p, stats, m, oh, ow, cp = conv_raw(x, w, stride, pad)
    scale, shift = bn_scale_shift(stats, gamma, beta, float(m), cp)
    a = bn_apply(y_p, scale, shift, relu)
    return a[:m].reshape(n, oh, ow, cp)


def se_gate(sq, w1, b1, w2, b2, cp):
    """Batched SE excite over all N samples (single Pallas block)."""
    c, cr = w1.shape
    n = sq.shape[0]
    w1p = jnp.zeros((cp, cr), jnp.float32).at[:c, :].set(w1)
    w2p = jnp.zeros((cr, cp), jnp.float32).at[:, :c].set(w2)
    b2p = jnp.zeros((1, cp), jnp.float32).at[0, :c].set(b2)
    return pl.pallas_call(
        se_gate_kernel,
        out_shape=jax.ShapeDtypeStruct((n, cp), jnp.float32),
    )(sq, w1p, b1.reshape(1, cr), w2p, b2p)


def bn_se_residual(y2, identity, gate, scale, shift):
    """out = relu(BN(y2) * gate + identity), gridded over samples."""
    n, hw, cp = y2.shape
    return pl.pallas_call(
        bn_se_res_kernel,
        out_shape=jax.ShapeDtypeStruct((n, hw, cp), jnp.float32),
        grid=(n,),
        in_specs=[
            pl.BlockSpec((1, hw, cp), lambda i: (i, 0, 0)),
            pl.BlockSpec((1, hw, cp), lambda i: (i, 0, 0)),
            pl.BlockSpec((1, 1, cp), lambda i: (i, 0, 0)),
            pl.BlockSpec((1, cp), lambda i: (0, 0)),
            pl.BlockSpec((1, cp), lambda i: (0, 0)),
        ],
        out_specs=pl.BlockSpec((1, hw, cp), lambda i: (i, 0, 0)),
        compiler_params=pltpu.CompilerParams(
            dimension_semantics=("parallel",),
            vmem_limit_bytes=VMEM_LIMIT),
    )(y2, identity, gate.reshape(n, 1, cp),
      scale.reshape(1, cp), shift.reshape(1, cp))


def linear(x, w, b):
    m, k = x.shape
    nout = w.shape[1]
    npad = _round_up(nout, LANE)           # lane-dense final FC output
    wp = jnp.zeros((k, npad), jnp.float32).at[:, :nout].set(w)
    bp = jnp.zeros((1, npad), jnp.float32).at[0, :nout].set(b)
    out = pl.pallas_call(
        linear_kernel,
        out_shape=jax.ShapeDtypeStruct((m, npad), jnp.float32),
    )(x, wp, bp)
    return out[:, :nout]


def maxpool_3x3_s2_p1(x):
    # nn.MaxPool2d(kernel_size=3, stride=2, padding=1): -inf padding never wins.
    return lax.reduce_window(
        x, -jnp.inf, lax.max,
        window_dimensions=(1, 3, 3, 1),
        window_strides=(1, 2, 2, 1),
        padding=((0, 0), (1, 1), (1, 1), (0, 0)))


# ----------------------------------------------------------------------------
# Parameter initialization (deterministic, synthetic)
# ----------------------------------------------------------------------------
def _conv_params(key, kh, kw, cin, cout):
    # Conv bias omitted: train-mode BatchNorm's mean subtraction cancels a
    # per-channel conv bias exactly, so it contributes nothing to the output.
    scale = 1.0 / np.sqrt(kh * kw * cin)
    return jax.random.normal(key, (kh, kw, cin, cout), jnp.float32) * scale


def _bn_params(key, c):
    k1, k2 = jax.random.split(key)
    gamma = 1.0 + 0.1 * jax.random.normal(k1, (c,), jnp.float32)
    beta = 0.1 * jax.random.normal(k2, (c,), jnp.float32)
    return gamma, beta


def _linear_params(key, cin, cout):
    k1, k2 = jax.random.split(key)
    scale = 1.0 / np.sqrt(cin)
    w = jax.random.normal(k1, (cin, cout), jnp.float32) * scale
    b = jax.random.normal(k2, (cout,), jnp.float32) * scale
    return w, b


def init_resnet_params(key, layers, image_channels, num_classes):
    keys = iter(jax.random.split(key, 256))
    nk = lambda: next(keys)

    params = {}
    params["stem_w"] = _conv_params(nk(), 7, 7, image_channels, 64)
    params["stem_bn_g"], params["stem_bn_b"] = _bn_params(nk(), 64)

    in_ch = 64
    layer_params = []
    for n_blocks, out_ch, stride in zip(layers, (64, 128, 256, 512), (1, 2, 2, 2)):
        blocks = []
        for bi in range(n_blocks):
            s = stride if bi == 0 else 1
            bp = {"stride": s}
            bp["conv1_w"] = _conv_params(nk(), 3, 3, in_ch, out_ch)
            bp["bn1_g"], bp["bn1_b"] = _bn_params(nk(), out_ch)
            bp["conv2_w"] = _conv_params(nk(), 3, 3, out_ch, out_ch)
            bp["bn2_g"], bp["bn2_b"] = _bn_params(nk(), out_ch)
            cr = out_ch // 2                      # ratio_reduce = 2
            bp["se_w1"], bp["se_b1"] = _linear_params(nk(), out_ch, cr)
            bp["se_w2"], bp["se_b2"] = _linear_params(nk(), cr, out_ch)
            if bi == 0 and stride != 1:
                bp["ds_w"] = _conv_params(nk(), 1, 1, in_ch, out_ch)
                bp["ds_bn_g"], bp["ds_bn_b"] = _bn_params(nk(), out_ch)
            blocks.append(bp)
            in_ch = out_ch
        layer_params.append(blocks)
    params["layers"] = layer_params
    params["fc_w"], params["fc_b"] = _linear_params(nk(), 512, num_classes)
    return params


# ----------------------------------------------------------------------------
# Forward pass
# ----------------------------------------------------------------------------
def block_forward(bp, x):
    n = x.shape[0]
    stride = bp["stride"]
    identity = x

    # conv1 + bn1 + relu
    h1 = conv_bn_act(x, bp["conv1_w"], bp["bn1_g"], bp["bn1_b"],
                     stride=1, pad=1, relu=True)

    # conv2 (stats accumulated in-kernel); BN2 apply is fused into the
    # SE / residual / ReLU kernel below.
    y2_p, stats2, m2, oh, ow, cp = conv_raw(h1, bp["conv2_w"], stride, 1)
    scale2, shift2 = bn_scale_shift(stats2, bp["bn2_g"], bp["bn2_b"],
                                    float(m2), cp)
    hw = oh * ow
    y2 = y2_p[:m2].reshape(n, hw, cp)

    if "ds_w" in bp:
        identity = conv_bn_act(identity, bp["ds_w"], bp["ds_bn_g"],
                               bp["ds_bn_b"], stride=stride, pad=0, relu=False)
    id_flat = identity.reshape(n, hw, cp)

    # SE squeeze of the BN output from per-sample raw means + the BN affine
    # (tiny [N, Cp] glue); excite FCs batched over N in one Pallas kernel.
    sq = jnp.mean(y2, axis=1) * scale2[None, :] + shift2[None, :]
    gate = se_gate(sq, bp["se_w1"], bp["se_b1"], bp["se_w2"], bp["se_b2"], cp)

    out = bn_se_residual(y2, id_flat, gate, scale2, shift2)
    return out.reshape(n, oh, ow, cp)


def resnet_forward(params, x_nchw):
    # Convert PyTorch NCHW input to the kernel's NHWC layout.
    x = jnp.transpose(x_nchw, (0, 2, 3, 1)).astype(jnp.float32)
    x = conv_bn_act(x, params["stem_w"], params["stem_bn_g"],
                    params["stem_bn_b"], stride=2, pad=3, relu=True)
    x = maxpool_3x3_s2_p1(x)
    for layer in params["layers"]:
        for bp in layer:
            x = block_forward(bp, x)
    # AdaptiveAvgPool2d((1,1)) + flatten (plain-JAX glue reduction).
    pooled = jnp.mean(x[..., :512], axis=(1, 2))          # [N, 512]
    return linear(pooled, params["fc_w"], params["fc_b"])


# ----------------------------------------------------------------------------
if __name__ == "__main__":
    key = jax.random.PRNGKey(0)
    k_param, k_input = jax.random.split(key)

    layers = [1, 1, 1, 1]        # one SE block per stage (small test config)
    image_channels = 3
    num_classes = 10
    batch = 2
    spatial = 32                 # 32 -> 16 (stem) -> 8 -> 8/4/2/1 through stages

    params = init_resnet_params(k_param, layers, image_channels, num_classes)
    x = jax.random.normal(
        k_input, (batch, image_channels, spatial, spatial), jnp.float32)

    logits = resnet_forward(params, x)
    logits = jax.block_until_ready(logits)

    assert logits.shape == (batch, num_classes), logits.shape
    assert bool(jnp.all(jnp.isfinite(logits)))
    print("KERNEL_OK")
</pallas_src>

<mosaic_0001>
module attributes {stable_mosaic.version = 11 : i64} {
  func.func @conv_stats_kernel(%arg0: i32, %arg1: i32, %arg2: i32, %arg3: memref<256x256xbf16, #tpu.memory_space<vmem>>, %arg4: memref<256x128xbf16, #tpu.memory_space<vmem>>, %arg5: memref<256x128xf32, #tpu.memory_space<vmem>>, %arg6: memref<8x128xf32, #tpu.memory_space<vmem>>, %arg7: memref<256x128xf32, #tpu.memory_space<vmem>>) attributes {dimension_semantics = [#tpu.dimension_semantics<parallel>, #tpu.dimension_semantics<arbitrary>, #tpu.dimension_semantics<arbitrary>], iteration_bounds = array<i64: 1, 2, 1>, scalar_prefetch = 0 : i64, scratch_operands = 1 : i64, tpu.core_type = #tpu.core_type<tc>, window_params = [{transform_indices = @transform_0, window_bounds = array<i64: 256, 256>}, {transform_indices = @transform_1, window_bounds = array<i64: 256, 128>}, {transform_indices = @transform_2, window_bounds = array<i64: 256, 128>}, {transform_indices = @transform_3, window_bounds = array<i64: 8, 128>}]} {
    %c0_i32 = arith.constant 0 : i32
    %0 = arith.cmpi eq, %arg2, %c0_i32 : i32
    %1 = arith.extui %0 : i1 to i32
    %c0_i32_0 = arith.constant 0 : i32
    %2 = arith.cmpi ne, %1, %c0_i32_0 : i32
    scf.if %2 {
      %cst_13 = arith.constant 0.000000e+00 : f32
      %17 = vector.broadcast %cst_13 : f32 to vector<256x128xf32>
      %c0_14 = arith.constant 0 : index
      %c0_15 = arith.constant 0 : index
      %18 = vector.load %arg7[%c0_14, %c0_15] : memref<256x128xf32, #tpu.memory_space<vmem>>, vector<256x128xf32>
      tpu.vector_store %arg7[%c0_14, %c0_15], %17 {strides = array<i32>} : memref<256x128xf32, #tpu.memory_space<vmem>>, vector<256x128xf32>,
    } else {
    }
    %c0_i32_1 = arith.constant 0 : i32
    %3 = arith.cmpi eq, %arg1, %c0_i32_1 : i32
    %c0_i32_2 = arith.constant 0 : i32
    %4 = arith.cmpi eq, %arg2, %c0_i32_2 : i32
    %5 = arith.andi %3, %4 : i1
    %6 = arith.extui %5 : i1 to i32
    %c0_i32_3 = arith.constant 0 : i32
    %7 = arith.cmpi ne, %6, %c0_i32_3 : i32
    scf.if %7 {
      %cst_13 = arith.constant 0.000000e+00 : f32
      %17 = vector.broadcast %cst_13 : f32 to vector<8x128xf32>
      %c0_14 = arith.constant 0 : index
      %c0_15 = arith.constant 0 : index
      %18 = vector.load %arg6[%c0_14, %c0_15] : memref<8x128xf32, #tpu.memory_space<vmem>>, vector<8x128xf32>
      tpu.vector_store %arg6[%c0_14, %c0_15], %17 {strides = array<i32>} : memref<8x128xf32, #tpu.memory_space<vmem>>, vector<8x128xf32>,
    } else {
    }
    %c0 = arith.constant 0 : index
    %c0_4 = arith.constant 0 : index
    %8 = vector.load %arg7[%c0, %c0_4] : memref<256x128xf32, #tpu.memory_space<vmem>>, vector<256x128xf32>
    %c0_5 = arith.constant 0 : index
    %c0_6 = arith.constant 0 : index
    %9 = vector.load %arg3[%c0_5, %c0_6] : memref<256x256xbf16, #tpu.memory_space<vmem>>, vector<256x256xbf16>
    %c0_7 = arith.constant 0 : index
    %c0_8 = arith.constant 0 : index
    %10 = vector.load %arg4[%c0_7, %c0_8] : memref<256x128xbf16, #tpu.memory_space<vmem>>, vector<256x128xbf16>
    %cst = arith.constant dense<0.000000e+00> : vector<256x128xf32>
    %11 = tpu.matmul %9, %10, %cst {dimension_numbers = #tpu.dot_dimension_numbers<[1], [0], [0], [1], [0, 0, 1, 1], [], []>} : vector<256x256xbf16>, vector<256x128xbf16>, vector<256x128xf32> -> vector<256x128xf32>
    %12 = arith.addf %8, %11 : vector<256x128xf32>
    %c0_9 = arith.constant 0 : index
    %c0_10 = arith.constant 0 : index
    %13 = vector.load %arg7[%c0_9, %c0_10] : memref<256x128xf32, #tpu.memory_space<vmem>>, vector<256x128xf32>
    tpu.vector_store %arg7[%c0_9, %c0_10], %12 {strides = array<i32>} : memref<256x128xf32, #tpu.memory_space<vmem>>, vector<256x128xf32>,
    %c0_i32_11 = arith.constant 0 : i32
    %14 = arith.cmpi eq, %arg2, %c0_i32_11 : i32
    %15 = arith.extui %14 : i1 to i32
    %c0_i32_12 = arith.constant 0 : i32
    %16 = arith.cmpi ne, %15, %c0_i32_12 : i32
    scf.if %16 {
      %c0_13 = arith.constant 0 : index
      %c0_14 = arith.constant 0 : index
      %17 = vector.load %arg7[%c0_13, %c0_14] : memref<256x128xf32, #tpu.memory_space<vmem>>, vector<256x128xf32>
      %c0_15 = arith.constant 0 : index
      %c0_16 = arith.constant 0 : index
      %18 = vector.load %arg5[%c0_15, %c0_16] : memref<256x128xf32, #tpu.memory_space<vmem>>, vector<256x128xf32>
      tpu.vector_store %arg5[%c0_15, %c0_16], %17 {strides = array<i32>} : memref<256x128xf32, #tpu.memory_space<vmem>>, vector<256x128xf32>,
      %cst_17 = arith.constant dense<0.000000e+00> : vector<128xf32>
      %19 = vector.multi_reduction <add>, %17, %cst_17 [0] : vector<256x128xf32> to vector<128xf32>
      %20 = vector.shape_cast %19 : vector<128xf32> to vector<1x128xf32>
      %21 = arith.mulf %17, %17 : vector<256x128xf32>
      %cst_18 = arith.constant dense<0.000000e+00> : vector<128xf32>
      %22 = vector.multi_reduction <add>, %21, %cst_18 [0] : vector<256x128xf32> to vector<128xf32>
      %23 = vector.shape_cast %22 : vector<128xf32> to vector<1x128xf32>
      %cst_19 = arith.constant 0.000000e+00 : f32
      %24 = vector.broadcast %cst_19 : f32 to vector<6x128xf32>
      %25 = tpu.concatenate %20, %23, %24 in 0 : vector<1x128xf32>, vector<1x128xf32>, vector<6x128xf32> -> vector<8x128xf32>
      %c0_20 = arith.constant 0 : index
      %c0_21 = arith.constant 0 : index
      %26 = vector.load %arg6[%c0_20, %c0_21] : memref<8x128xf32, #tpu.memory_space<vmem>>, vector<8x128xf32>
      %27 = arith.addf %26, %25 : vector<8x128xf32>
      %c0_22 = arith.constant 0 : index
      %c0_23 = arith.constant 0 : index
      %28 = vector.load %arg6[%c0_22, %c0_23] : memref<8x128xf32, #tpu.memory_space<vmem>>, vector<8x128xf32>
      tpu.vector_store %arg6[%c0_22, %c0_23], %27 {strides = array<i32>} : memref<8x128xf32, #tpu.memory_space<vmem>>, vector<8x128xf32>,
    } else {
    }
    return
  }
  func.func @transform_0(%arg0: i32, %arg1: i32, %arg2: i32) -> (i32, i32) {
    %c0_i32 = arith.constant 0 : i32
    return %arg1, %arg2 : i32, i32
  }
  func.func @transform_1(%arg0: i32, %arg1: i32, %arg2: i32) -> (i32, i32) {
    %c0_i32 = arith.constant 0 : i32
    return %arg2, %arg0 : i32, i32
  }
  func.func @transform_2(%arg0: i32, %arg1: i32, %arg2: i32) -> (i32, i32) {
    %c0_i32 = arith.constant 0 : i32
    return %arg1, %arg0 : i32, i32
  }
  func.func @transform_3(%arg0: i32, %arg1: i32, %arg2: i32) -> (i32, i32) {
    %c0_i32 = arith.constant 0 : i32
    %c0_i32_0 = arith.constant 0 : i32
    return %c0_i32, %arg0 : i32, i32
  }
}

</mosaic_0001>

<llo_original>
// kernel: tpu_custom_call.1
$region0: #{tpu_custom_call.1}
  #allocation0 [shape = 'u32[]', space=smem, size = 0x4, offset = 0x4, fixed_abs, tag = 'smem constant byte address 0x4 - core index']
  #allocation1 [shape = 'u32[144,128]{1,0:T(1,128)}', space=vmem, size = 0x12000, scoped, tag = 'internal scratch']
  #allocation2 [shape = 'f32[256,128]{1,0:T(8,128)}', space=vmem, size = 0x20000, scoped, tag = 'scratch operand']
  %s0 = inlined_call_operand.hbm [shape: bf16[512,256], index: 0, kind: input, shape index: {}]
  %s1 = inlined_call_operand.hbm [shape: bf16[256,128], index: 1, kind: input, shape index: {}]
  %s2 = inlined_call_operand.hbm [shape: f32[512,128], index: 2, kind: output, shape index: {0}]
  %s3 = inlined_call_operand.hbm [shape: f32[8,128], index: 3, kind: output, shape index: {1}]
  %4 = xla_tuple %s2, %s3
  %s5 = sld [smem:[#allocation0]]
  $region69: #{tpu_custom_call.1} parent=0
    _
  %s7 = ssub.s32 1, %s5
  %s8 = scalar_select 0, %s7, %s5
  $region1: #{tpu_custom_call.1} parent=0
    #allocation3 [shape = 'u8[262144]{0}', space=vmem, size = 0x40000, scoped, tag = 'input window, operand 0']
    #allocation4 [shape = 's32[2]{0}', space=sflag, size = 0x8, scoped, tag = 'scoped memory for tpu_custom_call.1']
    #allocation5 [shape = 's32[2]{0}', space=sflag, size = 0x8, scoped, tag = 'scoped memory for tpu_custom_call.1']
    #allocation6 [shape = 'u8[65536]{0}', space=vmem, size = 0x10000, scoped, tag = 'input window, operand 1, single buffered']
    #allocation7 [shape = 's32[1]{0}', space=sflag, size = 0x4, scoped, tag = 'scoped memory for tpu_custom_call.1']
    #allocation8 [shape = 'u8[262144]{0}', space=vmem, size = 0x40000, scoped, tag = 'output window, operand 0']
    #allocation9 [shape = 'u8[4096]{0}', space=vmem, size = 0x1000, scoped, tag = 'output window, operand 1, single buffered']
    #allocation10 [shape = 's32[1]{0}', space=sflag, size = 0x4, scoped, tag = 'scoped memory for tpu_custom_call.1']
    %9 = vsyncpa [#allocation4], 0
    %s10 = scalar_lea.sflag [#allocation4], 1
    %11 = vsyncpa %s10, 0
    %12 = vsyncpa [#allocation7], 0
    %13 = vsyncpa [#allocation5], 0
    %s14 = scalar_lea.sflag [#allocation5], 1
    %15 = vsyncpa %s14, 0
    %16 = vsyncpa [#allocation10], 0
    loop: start=0, step=1, limit=4
    $region2: #{tpu_custom_call.1} parent=1 // loop_pre_header
      _
    $region3: #{tpu_custom_call.1} parent=1 // loop_header
      %s18 = sphi 0, %s22
      %p19 = scmp.ge.s32.totalorder %s18, 4
      %s25 = sphi 0, %s44
      %s26 = sphi 0, %s40
      %s27 = sphi 0, %s36
      %s28 = sphi 0, %s25
      %s29 = sphi 0, %s26
      %s30 = sphi 0, %s27
      %s31 = sphi 0, %s28
      %s32 = sphi 0, %s29
      %s33 = sphi 0, %s30
      %s49 = sphi 0, %s51
      %s52 = sphi 0, %s49
      %s53 = sphi 0, %s52
      %s69 = sphi 0, %s53
      %s77 = sphi 0, %s79
      %s80 = sphi 0, %s77
      %s81 = sphi 0, %s80
      %s97 = sphi 0, %s81
      %s105 = sphi 0, %s107
      %s108 = sphi 0, %s105
      %s109 = sphi 0, %s108
      %s125 = sphi 0, %s109
      %s131 = sphi 0, %s133
      %s134 = sphi 0, %s131
      %s135 = sphi 0, %s134
      %s151 = sphi 0, %s135
    $region4: #{tpu_custom_call.1} parent=1 // loop_header_branch
      %21 = sbr.rel (%p19) target = $region8
    $region5: #{tpu_custom_call.1} parent=1 // loop_body
      %s23 = ssub.s32 %s18, 1
      %s24 = ssub.s32 %s18, 2
      %s34 = sadd.s32 1, %s27
      %p35 = scmp.ge.s32.totalorder %s34, 1
      %s36 = scalar_select %p35, 0, %s34
      %s37 = sadd.s32 1, %s26
      %s38 = scalar_select %p35, %s37, %s26
      %p39 = scmp.ge.s32.totalorder %s38, 2
      %s40 = scalar_select %p39, 0, %s38
      %s41 = sadd.s32 1, %s25
      %s42 = scalar_select %p39, %s41, %s25
      %p43 = scmp.ge.s32.totalorder %s42, 1
      %s44 = scalar_select %p43, 0, %s42
      %s45 = ssub.s32 %s26, %s40
      %s46 = ssub.s32 %s27, %s36
      %s47 = sor.u32 %s45, %s46
      %p48 = scmp.eq.s32.totalorder %s47, 0
      %s50 = sadd.s32 %s49, 1
      %s51 = scalar_select %p48, %s49, %s50
      %p54 = pneg %p48
      %p55 = scmp.eq.s32.totalorder %s18, 1
      %p56 = por %p54, %p55
      %p57 = scmp.ne.s32.totalorder %s49, %s52
      %p58 = scmp.eq.s32.totalorder %s18, 0
      %p59 = por %p57, %p58
      %p60 = scmp.ne.s32.totalorder %s49, %s52
      %p61 = scmp.eq.s32.totalorder %s23, 1
      %p62 = por %p60, %p61
      %p63 = scmp.ne.s32.totalorder %s52, %s53
      %p64 = scmp.eq.s32.totalorder %s23, 0
      %p65 = por %p63, %p64
      %p66 = scmp.ne.s32.totalorder %s52, %s53
      %p67 = scmp.eq.s32.totalorder %s24, 1
      %p68 = por %p66, %p67
      %p70 = scmp.ne.s32.totalorder %s53, %s69
      %p71 = scmp.eq.s32.totalorder %s24, 0
      %p72 = por %p70, %p71
      %s73 = ssub.s32 %s27, %s36
      %s74 = ssub.s32 %s25, %s44
      %s75 = sor.u32 %s73, %s74
      %p76 = scmp.eq.s32.totalorder %s75, 0
      %s78 = sadd.s32 %s77, 1
      %s79 = scalar_select %p76, %s77, %s78
      %p82 = pneg %p76
      %p83 = scmp.eq.s32.totalorder %s18, 1
      %p84 = por %p82, %p83
      %p85 = scmp.ne.s32.totalorder %s77, %s80
      %p86 = scmp.eq.s32.totalorder %s18, 0
      %p87 = por %p85, %p86
      %p88 = scmp.ne.s32.totalorder %s77, %s80
      %p89 = scmp.eq.s32.totalorder %s23, 1
      %p90 = por %p88, %p89
      %p91 = scmp.ne.s32.totalorder %s80, %s81
      %p92 = scmp.eq.s32.totalorder %s23, 0
      %p93 = por %p91, %p92
      %p94 = scmp.ne.s32.totalorder %s80, %s81
      %p95 = scmp.eq.s32.totalorder %s24, 1
      %p96 = por %p94, %p95
      %p98 = scmp.ne.s32.totalorder %s81, %s97
      %p99 = scmp.eq.s32.totalorder %s24, 0
      %p100 = por %p98, %p99
      %s101 = ssub.s32 %s26, %s40
      %s102 = ssub.s32 %s25, %s44
      %s103 = sor.u32 %s101, %s102
      %p104 = scmp.eq.s32.totalorder %s103, 0
      %s106 = sadd.s32 %s105, 1
      %s107 = scalar_select %p104, %s105, %s106
      %p110 = pneg %p104
      %p111 = scmp.eq.s32.totalorder %s18, 1
      %p112 = por %p110, %p111
      %p113 = scmp.ne.s32.totalorder %s105, %s108
      %p114 = scmp.eq.s32.totalorder %s18, 0
      %p115 = por %p113, %p114
      %p116 = scmp.ne.s32.totalorder %s105, %s108
      %p117 = scmp.eq.s32.totalorder %s23, 1
      %p118 = por %p116, %p117
      %p119 = scmp.ne.s32.totalorder %s108, %s109
      %p120 = scmp.eq.s32.totalorder %s23, 0
      %p121 = por %p119, %p120
      %p122 = scmp.ne.s32.totalorder %s108, %s109
      %p123 = scmp.eq.s32.totalorder %s24, 1
      %p124 = por %p122, %p123
      %p126 = scmp.ne.s32.totalorder %s109, %s125
      %p127 = scmp.eq.s32.totalorder %s24, 0
      %p128 = por %p126, %p127
      %s129 = ssub.s32 %s25, %s44
      %p130 = scmp.eq.s32.totalorder %s129, 0
      %s132 = sadd.s32 %s131, 1
      %s133 = scalar_select %p130, %s131, %s132
      %p136 = pneg %p130
      %p137 = scmp.eq.s32.totalorder %s18, 1
      %p138 = por %p136, %p137
      %p139 = scmp.ne.s32.totalorder %s131, %s134
      %p140 = scmp.eq.s32.totalorder %s18, 0
      %p141 = por %p139, %p140
      %p142 = scmp.ne.s32.totalorder %s131, %s134
      %p143 = scmp.eq.s32.totalorder %s23, 1
      %p144 = por %p142, %p143
      %p145 = scmp.ne.s32.totalorder %s134, %s135
      %p146 = scmp.eq.s32.totalorder %s23, 0
      %p147 = por %p145, %p146
      %p148 = scmp.ne.s32.totalorder %s134, %s135
      %p149 = scmp.eq.s32.totalorder %s24, 1
      %p150 = por %p148, %p149
      %p152 = scmp.ne.s32.totalorder %s135, %s151
      %p153 = scmp.eq.s32.totalorder %s24, 0
      %p154 = por %p152, %p153
      %p155 = scmp.le.s32.totalorder 1, %s18
      %p156 = scmp.lt.s32.totalorder %s18, 3
      %p157 = pnand %p155, %p156
      %p158 = pneg %p157
      // Predicated region
      $region9: #{tpu_custom_call.1} parent=5 // pred_check
        _
      $region10: #{tpu_custom_call.1} parent=5 // pred_check_branch
        %160 = sbr.rel (%p157) target = $region12
      $region11: #{tpu_custom_call.1} parent=5 // pred_region
        %s161 = ssub.s32 %s18, 1
        // Predicated region
        $region13: #{tpu_custom_call.1} parent=11 // pred_check
          %p162 = pneg %p93
        $region14: #{tpu_custom_call.1} parent=11 // pred_check_branch
          %164 = sbr.rel (%p162) target = $region16
        $region15: #{tpu_custom_call.1} parent=11 // pred_region
          %s165 = smul.u32 32, %s30
          %s167 = ssub.s32 2048, 2048
          %168 = vsyncadd [#allocation7], %s167
          %s169 = sadd.s32 %s28, %s165
          %s170 = smul.addr %s169, 64
          %s171 = scalar_lea.hbm %s1, %s170
          %s172 = sshll.u32 [#allocation6], 4
          %s173 = int_to_ptr.vmem [resolvable:$true] %s172
          %178 = dma.hbm_to_vmem [thread:$0]  %s171, 2048, %s173, [#allocation7], 64, 64, 4
        $region16: #{tpu_custom_call.1} parent=11 // pred_fallthru
          _
      $region12: #{tpu_custom_call.1} parent=5 // pred_fallthru
        _
      %p179 = scmp.lt.s32.totalorder %s18, 2
      // Predicated region
      $region17: #{tpu_custom_call.1} parent=5 // pred_check
        %p180 = pneg %p179
      $region18: #{tpu_custom_call.1} parent=5 // pred_check_branch
        %182 = sbr.rel (%p180) target = $region20
      $region19: #{tpu_custom_call.1} parent=5 // pred_region
        // Predicated region
        $region21: #{tpu_custom_call.1} parent=19 // pred_check
          %p183 = pneg %p59
        $region22: #{tpu_custom_call.1} parent=19 // pred_check_branch
          %185 = sbr.rel (%p183) target = $region24
        $region23: #{tpu_custom_call.1} parent=19 // pred_region
          %s186 = sand.u32 %s49, 1
          %s187 = scalar_lea.sflag [#allocation4], %s186
          %s188 = sand.u32 %s49, 1
          %s189 = smul.addr %s188, 256
          %s190 = scalar_lea.vmem [#allocation3], %s189
          %s191 = smul.u32 32, %s26
          %s192 = smul.u32 2, %s27
          %s194 = ssub.s32 4096, 4096
          %195 = vsyncadd %s187, %s194
          %s196 = smul.addr %s191, 2
          %s197 = sadd.s32 %s192, %s196
          %s198 = smul.addr %s197, 64
          %s199 = scalar_lea.hbm %s0, %s198
          %s200 = sshll.u32 %s190, 4
          %s201 = int_to_ptr.vmem [resolvable:$true] %s200
          %206 = dma.hbm_to_vmem [thread:$0]  %s199, 4096, %s201, %s187, 128, 128, 8
        $region24: #{tpu_custom_call.1} parent=19 // pred_fallthru
          _
      $region20: #{tpu_custom_call.1} parent=5 // pred_fallthru
        _
      %p207 = scmp.le.s32.totalorder 1, %s18
      %p208 = scmp.lt.s32.totalorder %s18, 3
      %p209 = pnand %p207, %p208
      %p210 = pneg %p209
      // Predicated region
      $region25: #{tpu_custom_call.1} parent=5 // pred_check
        _
      $region26: #{tpu_custom_call.1} parent=5 // pred_check_branch
        %212 = sbr.rel (%p209) target = $region28
      $region27: #{tpu_custom_call.1} parent=5 // pred_region
        %s213 = ssub.s32 %s18, 1
        %s214 = sand.u32 %s52, 1
        %s215 = scalar_lea.sflag [#allocation4], %s214
        %s216 = sand.u32 %s52, 1
        %s217 = smul.addr %s216, 256
        %s218 = scalar_lea.vmem [#allocation3], %s217
        // Predicated region
        $region29: #{tpu_custom_call.1} parent=27 // pred_check
          %p219 = pneg %p65
        $region30: #{tpu_custom_call.1} parent=27 // pred_check_branch
          %221 = sbr.rel (%p219) target = $region32
        $region31: #{tpu_custom_call.1} parent=27 // pred_region
          %222 = dma.done %s215, 4096
        $region32: #{tpu_custom_call.1} parent=27 // pred_fallthru
          _
        // Predicated region
        $region33: #{tpu_custom_call.1} parent=27 // pred_check
          %p223 = pneg %p93
        $region34: #{tpu_custom_call.1} parent=27 // pred_check_branch
          %225 = sbr.rel (%p223) target = $region36
        $region35: #{tpu_custom_call.1} parent=27 // pred_region
          %226 = dma.done [#allocation7], 2048
        $region36: #{tpu_custom_call.1} parent=27 // pred_fallthru
          _
        %s227 = sand.u32 %s52, 1
        %s228 = scalar_lea.sflag [#allocation4], %s227
        %s229 = sand.u32 %s52, 1
        %s230 = smul.addr %s229, 256
        %s231 = scalar_lea.vmem [#allocation3], %s230
        %p232 = pneg %p65
        %p233 = pneg %p62
        %p234 = pneg %p93
        %p235 = pneg %p90
        %p236 = pneg %p121
        %p237 = pneg %p118
        %s238 = sand.u32 %s108, 1
        %s239 = scalar_lea.sflag [#allocation5], %s238
        %s240 = sand.u32 %s108, 1
        %s241 = smul.addr %s240, 256
        %s242 = scalar_lea.vmem [#allocation8], %s241
        %p243 = pneg %p147
        %p244 = pneg %p144
        %s245 = smul.u32 32, %s29
        %s246 = smul.u32 2, %s30
        %s247 = smul.u32 32, %s30
        %s248 = smul.u32 32, %s29
        %p250 = scmp.eq.s32.totalorder %s30, 0
        // Predicated region
        $region37: #{tpu_custom_call.1} parent=27 // pred_check
          %p251 = pneg %p250
        $region38: #{tpu_custom_call.1} parent=27 // pred_check_branch
          %253 = sbr.rel (%p251) target = $region40
        $region39: #{tpu_custom_call.1} parent=27 // pred_region
          %254 = vst [vmem:[#allocation2] sm:$0xff] 0.0
          %255 = vst [vmem:[#allocation2 + $0x8] sm:$0xff] 0.0
          %256 = vst [vmem:[#allocation2 + $0x10] sm:$0xff] 0.0
          %257 = vst [vmem:[#allocation2 + $0x18] sm:$0xff] 0.0
          %258 = vst [vmem:[#allocation2 + $0x20] sm:$0xff] 0.0
          %259 = vst [vmem:[#allocation2 + $0x28] sm:$0xff] 0.0
          %260 = vst [vmem:[#allocation2 + $0x30] sm:$0xff] 0.0
          %261 = vst [vmem:[#allocation2 + $0x38] sm:$0xff] 0.0
          %262 = vst [vmem:[#allocation2 + $0x40] sm:$0xff] 0.0
          %263 = vst [vmem:[#allocation2 + $0x48] sm:$0xff] 0.0
          %264 = vst [vmem:[#allocation2 + $0x50] sm:$0xff] 0.0
          %265 = vst [vmem:[#allocation2 + $0x58] sm:$0xff] 0.0
          %266 = vst [vmem:[#allocation2 + $0x60] sm:$0xff] 0.0
          %267 = vst [vmem:[#allocation2 + $0x68] sm:$0xff] 0.0
          %268 = vst [vmem:[#allocation2 + $0x70] sm:$0xff] 0.0
          %269 = vst [vmem:[#allocation2 + $0x78] sm:$0xff] 0.0
          %270 = vst [vmem:[#allocation2 + $0x80] sm:$0xff] 0.0
          %271 = vst [vmem:[#allocation2 + $0x88] sm:$0xff] 0.0
          %272 = vst [vmem:[#allocation2 + $0x90] sm:$0xff] 0.0
          %273 = vst [vmem:[#allocation2 + $0x98] sm:$0xff] 0.0
          %274 = vst [vmem:[#allocation2 + $0xa0] sm:$0xff] 0.0
          %275 = vst [vmem:[#allocation2 + $0xa8] sm:$0xff] 0.0
          %276 = vst [vmem:[#allocation2 + $0xb0] sm:$0xff] 0.0
          %277 = vst [vmem:[#allocation2 + $0xb8] sm:$0xff] 0.0
          %278 = vst [vmem:[#allocation2 + $0xc0] sm:$0xff] 0.0
          %279 = vst [vmem:[#allocation2 + $0xc8] sm:$0xff] 0.0
          %280 = vst [vmem:[#allocation2 + $0xd0] sm:$0xff] 0.0
          %281 = vst [vmem:[#allocation2 + $0xd8] sm:$0xff] 0.0
          %282 = vst [vmem:[#allocation2 + $0xe0] sm:$0xff] 0.0
          %283 = vst [vmem:[#allocation2 + $0xe8] sm:$0xff] 0.0
          %284 = vst [vmem:[#allocation2 + $0xf0] sm:$0xff] 0.0
          %285 = vst [vmem:[#allocation2 + $0xf8] sm:$0xff] 0.0
        $region40: #{tpu_custom_call.1} parent=27 // pred_fallthru
          _
        %p286 = scmp.eq.s32.totalorder %s29, 0
        %p287 = pnand %p286, %p250
        %p288 = pneg %p287
        // Predicated region
        $region41: #{tpu_custom_call.1} parent=27 // pred_check
          _
        $region42: #{tpu_custom_call.1} parent=27 // pred_check_branch
          %290 = sbr.rel (%p287) target = $region44
        $region43: #{tpu_custom_call.1} parent=27 // pred_region
          %291 = vst [vmem:[#allocation9] sm:$0xff] 0.0
        $region44: #{tpu_custom_call.1} parent=27 // pred_fallthru
          _
        %v292 = vld [vmem:[#allocation2] sm:$0xff]
        %v293 = vld [vmem:[#allocation2 + $0x8] sm:$0xff]
        %v294 = vld [vmem:[#allocation2 + $0x10] sm:$0xff]
        %v295 = vld [vmem:[#allocation2 + $0x18] sm:$0xff]
        %v296 = vld [vmem:[#allocation2 + $0x20] sm:$0xff]
        %v297 = vld [vmem:[#allocation2 + $0x28] sm:$0xff]
        %v298 = vld [vmem:[#allocation2 + $0x30] sm:$0xff]
        %v299 = vld [vmem:[#allocation2 + $0x38] sm:$0xff]
        %v300 = vld [vmem:[#allocation2 + $0x40] sm:$0xff]
        %v301 = vld [vmem:[#allocation2 + $0x48] sm:$0xff]
        %v302 = vld [vmem:[#allocation2 + $0x50] sm:$0xff]
        %v303 = vld [vmem:[#allocation2 + $0x58] sm:$0xff]
        %v304 = vld [vmem:[#allocation2 + $0x60] sm:$0xff]
        %v305 = vld [vmem:[#allocation2 + $0x68] sm:$0xff]
        %v306 = vld [vmem:[#allocation2 + $0x70] sm:$0xff]
        %v307 = vld [vmem:[#allocation2 + $0x78] sm:$0xff]
        %v308 = vld [vmem:[#allocation2 + $0x80] sm:$0xff]
        %v309 = vld [vmem:[#allocation2 + $0x88] sm:$0xff]
        %v310 = vld [vmem:[#allocation2 + $0x90] sm:$0xff]
        %v311 = vld [vmem:[#allocation2 + $0x98] sm:$0xff]
        %v312 = vld [vmem:[#allocation2 + $0xa0] sm:$0xff]
        %v313 = vld [vmem:[#allocation2 + $0xa8] sm:$0xff]
        %v314 = vld [vmem:[#allocation2 + $0xb0] sm:$0xff]
        %v315 = vld [vmem:[#allocation2 + $0xb8] sm:$0xff]
        %v316 = vld [vmem:[#allocation2 + $0xc0] sm:$0xff]
        %v317 = vld [vmem:[#allocation2 + $0xc8] sm:$0xff]
        %v318 = vld [vmem:[#allocation2 + $0xd0] sm:$0xff]
        %v319 = vld [vmem:[#allocation2 + $0xd8] sm:$0xff]
        %v320 = vld [vmem:[#allocation2 + $0xe0] sm:$0xff]
        %v321 = vld [vmem:[#allocation2 + $0xe8] sm:$0xff]
        %v322 = vld [vmem:[#allocation2 + $0xf0] sm:$0xff]
        %v323 = vld [vmem:[#allocation2 + $0xf8] sm:$0xff]
        %v324 = vld [vmem:[%s218] sm:$0xff]
        %v325 = vld [vmem:[%s218 + $0x8] sm:$0xff]
        %v326 = vld [vmem:[%s218 + $0x10] sm:$0xff]
        %v327 = vld [vmem:[%s218 + $0x18] sm:$0xff]
        %v328 = vld [vmem:[%s218 + $0x20] sm:$0xff]
        %v329 = vld [vmem:[%s218 + $0x28] sm:$0xff]
        %v330 = vld [vmem:[%s218 + $0x30] sm:$0xff]
        %v331 = vld [vmem:[%s218 + $0x38] sm:$0xff]
        %v332 = vld [vmem:[%s218 + $0x40] sm:$0xff]
        %v333 = vld [vmem:[%s218 + $0x48] sm:$0xff]
        %v334 = vld [vmem:[%s218 + $0x50] sm:$0xff]
        %v335 = vld [vmem:[%s218 + $0x58] sm:$0xff]
        %v336 = vld [vmem:[%s218 + $0x60] sm:$0xff]
        %v337 = vld [vmem:[%s218 + $0x68] sm:$0xff]
        %v338 = vld [vmem:[%s218 + $0x70] sm:$0xff]
        %v339 = vld [vmem:[%s218 + $0x78] sm:$0xff]
        %v340 = vld [vmem:[%s218 + $0x80] sm:$0xff]
        %v341 = vld [vmem:[%s218 + $0x88] sm:$0xff]
        %v342 = vld [vmem:[%s218 + $0x90] sm:$0xff]
        %v343 = vld [vmem:[%s218 + $0x98] sm:$0xff]
        %v344 = vld [vmem:[%s218 + $0xa0] sm:$0xff]
        %v345 = vld [vmem:[%s218 + $0xa8] sm:$0xff]
        %v346 = vld [vmem:[%s218 + $0xb0] sm:$0xff]
        %v347 = vld [vmem:[%s218 + $0xb8] sm:$0xff]
        %v348 = vld [vmem:[%s218 + $0xc0] sm:$0xff]
        %v349 = vld [vmem:[%s218 + $0xc8] sm:$0xff]
        %v350 = vld [vmem:[%s218 + $0xd0] sm:$0xff]
        %v351 = vld [vmem:[%s218 + $0xd8] sm:$0xff]
        %v352 = vld [vmem:[%s218 + $0xe0] sm:$0xff]
        %v353 = vld [vmem:[%s218 + $0xe8] sm:$0xff]
        %v354 = vld [vmem:[%s218 + $0xf0] sm:$0xff]
        %v355 = vld [vmem:[%s218 + $0xf8] sm:$0xff]
        %v356 = vld [vmem:[#allocation6] sm:$0xf]
        %v357 = vld [vmem:[#allocation6 + $0x4] sm:$0xf]
        %v358 = vld [vmem:[#allocation6 + $0x8] sm:$0xf]
        %v359 = vld [vmem:[#allocation6 + $0xc] sm:$0xf]
        %v360 = vld [vmem:[#allocation6 + $0x10] sm:$0xf]
        %v361 = vld [vmem:[#allocation6 + $0x14] sm:$0xf]
        %v362 = vld [vmem:[#allocation6 + $0x18] sm:$0xf]
        %v363 = vld [vmem:[#allocation6 + $0x1c] sm:$0xf]
        %v364 = vld [vmem:[#allocation6 + $0x20] sm:$0xf]
        %v365 = vld [vmem:[#allocation6 + $0x24] sm:$0xf]
        %v366 = vld [vmem:[#allocation6 + $0x28] sm:$0xf]
        %v367 = vld [vmem:[#allocation6 + $0x2c] sm:$0xf]
        %v368 = vld [vmem:[#allocation6 + $0x30] sm:$0xf]
        %v369 = vld [vmem:[#allocation6 + $0x34] sm:$0xf]
        %v370 = vld [vmem:[#allocation6 + $0x38] sm:$0xf]
        %v371 = vld [vmem:[#allocation6 + $0x3c] sm:$0xf]
        %v372 = vld [vmem:[#allocation6 + $0x40] sm:$0xf]
        %v373 = vld [vmem:[#allocation6 + $0x44] sm:$0xf]
        %v374 = vld [vmem:[#allocation6 + $0x48] sm:$0xf]
        %v375 = vld [vmem:[#allocation6 + $0x4c] sm:$0xf]
        %v376 = vld [vmem:[#allocation6 + $0x50] sm:$0xf]
        %v377 = vld [vmem:[#allocation6 + $0x54] sm:$0xf]
        %v378 = vld [vmem:[#allocation6 + $0x58] sm:$0xf]
        %v379 = vld [vmem:[#allocation6 + $0x5c] sm:$0xf]
        %v380 = vld [vmem:[#allocation6 + $0x60] sm:$0xf]
        %v381 = vld [vmem:[#allocation6 + $0x64] sm:$0xf]
        %v382 = vld [vmem:[#allocation6 + $0x68] sm:$0xf]
        %v383 = vld [vmem:[#allocation6 + $0x6c] sm:$0xf]
        %v384 = vld [vmem:[#allocation6 + $0x70] sm:$0xf]
        %v385 = vld [vmem:[#allocation6 + $0x74] sm:$0xf]
        %v386 = vld [vmem:[#allocation6 + $0x78] sm:$0xf]
        %v387 = vld [vmem:[#allocation6 + $0x7c] sm:$0xf]
        %v420 = vunpack.c.l.b16 %v324
        %v421 = vunpack.c.h.b16 %v324
        %v422 = vunpack.c.l.b16 %v325
        %v423 = vunpack.c.h.b16 %v325
        %v424 = vunpack.c.l.b16 %v326
        %v425 = vunpack.c.h.b16 %v326
        %v426 = vunpack.c.l.b16 %v327
        %v427 = vunpack.c.h.b16 %v327
        %v428 = vunpack.c.l.b16 %v328
        %v429 = vunpack.c.h.b16 %v328
        %v430 = vunpack.c.l.b16 %v329
        %v431 = vunpack.c.h.b16 %v329
        %v432 = vunpack.c.l.b16 %v330
        %v433 = vunpack.c.h.b16 %v330
        %v434 = vunpack.c.l.b16 %v331
        %v435 = vunpack.c.h.b16 %v331
        %v436 = vunpack.c.l.b16 %v332
        %v437 = vunpack.c.h.b16 %v332
        %v438 = vunpack.c.l.b16 %v333
        %v439 = vunpack.c.h.b16 %v333
        %v440 = vunpack.c.l.b16 %v334
        %v441 = vunpack.c.h.b16 %v334
        %v442 = vunpack.c.l.b16 %v335
        %v443 = vunpack.c.h.b16 %v335
        %v444 = vunpack.c.l.b16 %v336
        %v445 = vunpack.c.h.b16 %v336
        %v446 = vunpack.c.l.b16 %v337
        %v447 = vunpack.c.h.b16 %v337
        %v448 = vunpack.c.l.b16 %v338
        %v449 = vunpack.c.h.b16 %v338
        %v450 = vunpack.c.l.b16 %v339
        %v451 = vunpack.c.h.b16 %v339
        %v452 = vunpack.c.l.b16 %v340
        %v453 = vunpack.c.h.b16 %v340
        %v454 = vunpack.c.l.b16 %v341
        %v455 = vunpack.c.h.b16 %v341
        %v456 = vunpack.c.l.b16 %v342
        %v457 = vunpack.c.h.b16 %v342
        %v458 = vunpack.c.l.b16 %v343
        %v459 = vunpack.c.h.b16 %v343
        %v460 = vunpack.c.l.b16 %v344
        %v461 = vunpack.c.h.b16 %v344
        %v462 = vunpack.c.l.b16 %v345
        %v463 = vunpack.c.h.b16 %v345
        %v464 = vunpack.c.l.b16 %v346
        %v465 = vunpack.c.h.b16 %v346
        %v466 = vunpack.c.l.b16 %v347
        %v467 = vunpack.c.h.b16 %v347
        %v468 = vunpack.c.l.b16 %v348
        %v469 = vunpack.c.h.b16 %v348
        %v470 = vunpack.c.l.b16 %v349
        %v471 = vunpack.c.h.b16 %v349
        %v472 = vunpack.c.l.b16 %v350
        %v473 = vunpack.c.h.b16 %v350
        %v474 = vunpack.c.l.b16 %v351
        %v475 = vunpack.c.h.b16 %v351
        %v476 = vunpack.c.l.b16 %v352
        %v477 = vunpack.c.h.b16 %v352
        %v478 = vunpack.c.l.b16 %v353
        %v479 = vunpack.c.h.b16 %v353
        %v480 = vunpack.c.l.b16 %v354
        %v481 = vunpack.c.h.b16 %v354
        %v482 = vunpack.c.l.b16 %v355
        %v483 = vunpack.c.h.b16 %v355
        %v484 = vpack.c.b16 %v422, %v420
        %v485 = vpack.c.b16 %v423, %v421
        %v486 = vpack.c.b16 %v426, %v424
        %v487 = vpack.c.b16 %v427, %v425
        %v488 = vpack.c.b16 %v430, %v428
        %v489 = vpack.c.b16 %v431, %v429
        %v490 = vpack.c.b16 %v434, %v432
        %v491 = vpack.c.b16 %v435, %v433
        %v492 = vpack.c.b16 %v438, %v436
        %v493 = vpack.c.b16 %v439, %v437
        %v494 = vpack.c.b16 %v442, %v440
        %v495 = vpack.c.b16 %v443, %v441
        %v496 = vpack.c.b16 %v446, %v444
        %v497 = vpack.c.b16 %v447, %v445
        %v498 = vpack.c.b16 %v450, %v448
        %v499 = vpack.c.b16 %v451, %v449
        %v500 = vpack.c.b16 %v454, %v452
        %v501 = vpack.c.b16 %v455, %v453
        %v502 = vpack.c.b16 %v458, %v456
        %v503 = vpack.c.b16 %v459, %v457
        %v504 = vpack.c.b16 %v462, %v460
        %v505 = vpack.c.b16 %v463, %v461
        %v506 = vpack.c.b16 %v466, %v464
        %v507 = vpack.c.b16 %v467, %v465
        %v508 = vpack.c.b16 %v470, %v468
        %v509 = vpack.c.b16 %v471, %v469
        %v510 = vpack.c.b16 %v474, %v472
        %v511 = vpack.c.b16 %v475, %v473
        %v512 = vpack.c.b16 %v478, %v476
        %v513 = vpack.c.b16 %v479, %v477
        %v514 = vpack.c.b16 %v482, %v480
        %v515 = vpack.c.b16 %v483, %v481
        %v580 = vunpack.c.l.b16 %v356
        %v581 = vunpack.c.l.b16 %v357
        %v582 = vunpack.c.l.b16 %v358
        %v583 = vunpack.c.l.b16 %v359
        %v584 = vunpack.c.l.b16 %v360
        %v585 = vunpack.c.l.b16 %v361
        %v586 = vunpack.c.l.b16 %v362
        %v587 = vunpack.c.l.b16 %v363
        %v588 = vunpack.c.l.b16 %v364
        %v589 = vunpack.c.l.b16 %v365
        %v590 = vunpack.c.l.b16 %v366
        %v591 = vunpack.c.l.b16 %v367
        %v592 = vunpack.c.l.b16 %v368
        %v593 = vunpack.c.l.b16 %v369
        %v594 = vunpack.c.l.b16 %v370
        %v595 = vunpack.c.l.b16 %v371
        %v596 = vunpack.c.l.b16 %v372
        %v597 = vunpack.c.l.b16 %v373
        %v598 = vunpack.c.l.b16 %v374
        %v599 = vunpack.c.l.b16 %v375
        %v600 = vunpack.c.l.b16 %v376
        %v601 = vunpack.c.l.b16 %v377
        %v602 = vunpack.c.l.b16 %v378
        %v603 = vunpack.c.l.b16 %v379
        %v604 = vunpack.c.l.b16 %v380
        %v605 = vunpack.c.l.b16 %v381
        %v606 = vunpack.c.l.b16 %v382
        %v607 = vunpack.c.l.b16 %v383
        %v608 = vunpack.c.l.b16 %v384
        %v609 = vunpack.c.l.b16 %v385
        %v610 = vunpack.c.l.b16 %v386
        %v611 = vunpack.c.l.b16 %v387
        %v612 = vpack.c.b16 %v581, %v580
        %v613 = vpack.c.b16 %v583, %v582
        %v614 = vpack.c.b16 %v585, %v584
        %v615 = vpack.c.b16 %v587, %v586
        %v616 = vpack.c.b16 %v589, %v588
        %v617 = vpack.c.b16 %v591, %v590
        %v618 = vpack.c.b16 %v593, %v592
        %v619 = vpack.c.b16 %v595, %v594
        %v620 = vpack.c.b16 %v597, %v596
        %v621 = vpack.c.b16 %v599, %v598
        %v622 = vpack.c.b16 %v601, %v600
        %v623 = vpack.c.b16 %v603, %v602
        %v624 = vpack.c.b16 %v605, %v604
        %v625 = vpack.c.b16 %v607, %v606
        %v626 = vpack.c.b16 %v609, %v608
        %v627 = vpack.c.b16 %v611, %v610
        %644 = vmatprep.subr.bf16.mxu0 0
        %645 = vmatpush1.bf16.msra.mxu0 %v619
        %646 = vmatprep.subr.bf16.mxu0 0
        %647 = vmatpush1.bf16.msra.mxu0 %v618
        %648 = vmatprep.subr.bf16.mxu0 0
        %649 = vmatpush1.bf16.msra.mxu0 %v617
        %650 = vmatprep.subr.bf16.mxu0 0
        %651 = vmatpush1.bf16.msra.mxu0 %v616
        %652 = vmatprep.subr.bf16.mxu0 0
        %653 = vmatpush1.bf16.msra.mxu0 %v615
        %654 = vmatprep.subr.bf16.mxu0 0
        %655 = vmatpush1.bf16.msra.mxu0 %v614
        %656 = vmatprep.subr.bf16.mxu0 0
        %657 = vmatpush1.bf16.msra.mxu0 %v613
        %658 = vmatprep.subr.bf16.mxu0 0
        %659 = vmatpush1.bf16.msra.mxu0 %v612
        %660 = vmatprep.subr.bf16.mxu0 0
        %661 = vmatpush2.bf16.msra.mxu0 %v627
        %662 = vmatprep.subr.bf16.mxu0 0
        %663 = vmatpush2.bf16.msra.mxu0 %v626
        %664 = vmatprep.subr.bf16.mxu0 0
        %665 = vmatpush2.bf16.msra.mxu0 %v625
        %666 = vmatprep.subr.bf16.mxu0 0
        %667 = vmatpush2.bf16.msra.mxu0 %v624
        %668 = vmatprep.subr.bf16.mxu0 0
        %669 = vmatpush2.bf16.msra.mxu0 %v623
        %670 = vmatprep.subr.bf16.mxu0 0
        %671 = vmatpush2.bf16.msra.mxu0 %v622
        %672 = vmatprep.subr.bf16.mxu0 0
        %673 = vmatpush2.bf16.msra.mxu0 %v621
        %674 = vmatprep.subr.bf16.mxu0 0
        %675 = vmatpush2.bf16.msra.mxu0 %v620
        %676 = vmatprep.mubr.bf16.mxu0 %v485
        %677 = vmatmul.mubr.bf16.gmra.mxu0 %v484
        %v678 = vpop.f32.mrf.mxu0
        %v679 = vadd.f32 0.0, %v678
        %v680 = vpop.f32.mrf.mxu0
        %v681 = vpop.f32.mrf.mxu0
        %v682 = vadd.f32 0.0, %v681
        %v683 = vpop.f32.mrf.mxu0
        %684 = vmatprep.mubr.bf16.mxu0 %v487
        %685 = vmatmul.mubr.bf16.gmra.mxu0 %v486
        %v686 = vpop.f32.mrf.mxu0
        %v687 = vadd.f32 0.0, %v686
        %v688 = vpop.f32.mrf.mxu0
        %v689 = vpop.f32.mrf.mxu0
        %v690 = vadd.f32 0.0, %v689
        %v691 = vpop.f32.mrf.mxu0
        %692 = vmatprep.mubr.bf16.mxu0 %v489
        %693 = vmatmul.mubr.bf16.gmra.mxu0 %v488
        %v694 = vpop.f32.mrf.mxu0
        %v695 = vadd.f32 0.0, %v694
        %v696 = vpop.f32.mrf.mxu0
        %v697 = vpop.f32.mrf.mxu0
        %v698 = vadd.f32 0.0, %v697
        %v699 = vpop.f32.mrf.mxu0
        %700 = vmatprep.mubr.bf16.mxu0 %v491
        %701 = vmatmul.mubr.bf16.gmra.mxu0 %v490
        %v702 = vpop.f32.mrf.mxu0
        %v703 = vadd.f32 0.0, %v702
        %v704 = vpop.f32.mrf.mxu0
        %v705 = vpop.f32.mrf.mxu0
        %v706 = vadd.f32 0.0, %v705
        %v707 = vpop.f32.mrf.mxu0
        %708 = vmatprep.mubr.bf16.mxu0 %v493
        %709 = vmatmul.mubr.bf16.gmra.mxu0 %v492
        %v710 = vpop.f32.mrf.mxu0
        %v711 = vadd.f32 0.0, %v710
        %v712 = vpop.f32.mrf.mxu0
        %v713 = vpop.f32.mrf.mxu0
        %v714 = vadd.f32 0.0, %v713
        %v715 = vpop.f32.mrf.mxu0
        %716 = vmatprep.mubr.bf16.mxu0 %v495
        %717 = vmatmul.mubr.bf16.gmra.mxu0 %v494
        %v718 = vpop.f32.mrf.mxu0
        %v719 = vadd.f32 0.0, %v718
        %v720 = vpop.f32.mrf.mxu0
        %v721 = vpop.f32.mrf.mxu0
        %v722 = vadd.f32 0.0, %v721
        %v723 = vpop.f32.mrf.mxu0
        %724 = vmatprep.mubr.bf16.mxu0 %v497
        %725 = vmatmul.mubr.bf16.gmra.mxu0 %v496
        %v726 = vpop.f32.mrf.mxu0
        %v727 = vadd.f32 0.0, %v726
        %v728 = vpop.f32.mrf.mxu0
        %v729 = vpop.f32.mrf.mxu0
        %v730 = vadd.f32 0.0, %v729
        %v731 = vpop.f32.mrf.mxu0
        %732 = vmatprep.mubr.bf16.mxu0 %v499
        %733 = vmatmul.mubr.bf16.gmra.mxu0 %v498
        %v734 = vpop.f32.mrf.mxu0
        %v735 = vadd.f32 0.0, %v734
        %v736 = vpop.f32.mrf.mxu0
        %v737 = vpop.f32.mrf.mxu0
        %v738 = vadd.f32 0.0, %v737
        %v739 = vpop.f32.mrf.mxu0
        %740 = vmatprep.mubr.bf16.mxu0 %v501
        %741 = vmatmul.mubr.bf16.gmra.mxu0 %v500
        %v742 = vpop.f32.mrf.mxu0
        %v743 = vadd.f32 0.0, %v742
        %v744 = vpop.f32.mrf.mxu0
        %v745 = vpop.f32.mrf.mxu0
        %v746 = vadd.f32 0.0, %v745
        %v747 = vpop.f32.mrf.mxu0
        %748 = vmatprep.mubr.bf16.mxu0 %v503
        %749 = vmatmul.mubr.bf16.gmra.mxu0 %v502
        %v750 = vpop.f32.mrf.mxu0
        %v751 = vadd.f32 0.0, %v750
        %v752 = vpop.f32.mrf.mxu0
        %v753 = vpop.f32.mrf.mxu0
        %v754 = vadd.f32 0.0, %v753
        %v755 = vpop.f32.mrf.mxu0
        %756 = vmatprep.mubr.bf16.mxu0 %v505
        %757 = vmatmul.mubr.bf16.gmra.mxu0 %v504
        %v758 = vpop.f32.mrf.mxu0
        %v759 = vadd.f32 0.0, %v758
        %v760 = vpop.f32.mrf.mxu0
        %v761 = vpop.f32.mrf.mxu0
        %v762 = vadd.f32 0.0, %v761
        %v763 = vpop.f32.mrf.mxu0
        %764 = vmatprep.mubr.bf16.mxu0 %v507
        %765 = vmatmul.mubr.bf16.gmra.mxu0 %v506
        %v766 = vpop.f32.mrf.mxu0
        %v767 = vadd.f32 0.0, %v766
        %v768 = vpop.f32.mrf.mxu0
        %v769 = vpop.f32.mrf.mxu0
        %v770 = vadd.f32 0.0, %v769
        %v771 = vpop.f32.mrf.mxu0
        %772 = vmatprep.mubr.bf16.mxu0 %v509
        %773 = vmatmul.mubr.bf16.gmra.mxu0 %v508
        %v774 = vpop.f32.mrf.mxu0
        %v775 = vadd.f32 0.0, %v774
        %v776 = vpop.f32.mrf.mxu0
        %v777 = vpop.f32.mrf.mxu0
        %v778 = vadd.f32 0.0, %v777
        %v779 = vpop.f32.mrf.mxu0
        %780 = vmatprep.mubr.bf16.mxu0 %v511
        %781 = vmatmul.mubr.bf16.gmra.mxu0 %v510
        %v782 = vpop.f32.mrf.mxu0
        %v783 = vadd.f32 0.0, %v782
        %v784 = vpop.f32.mrf.mxu0
        %v785 = vpop.f32.mrf.mxu0
        %v786 = vadd.f32 0.0, %v785
        %v787 = vpop.f32.mrf.mxu0
        %788 = vmatprep.mubr.bf16.mxu0 %v513
        %789 = vmatmul.mubr.bf16.gmra.mxu0 %v512
        %v790 = vpop.f32.mrf.mxu0
        %v791 = vadd.f32 0.0, %v790
        %v792 = vpop.f32.mrf.mxu0
        %v793 = vpop.f32.mrf.mxu0
        %v794 = vadd.f32 0.0, %v793
        %v795 = vpop.f32.mrf.mxu0
        %796 = vmatprep.mubr.bf16.mxu0 %v515
        %797 = vmatmul.mubr.bf16.gmra.mxu0 %v514
        %v798 = vpop.f32.mrf.mxu0
        %v799 = vadd.f32 0.0, %v798
        %v800 = vpop.f32.mrf.mxu0
        %v801 = vpop.f32.mrf.mxu0
        %v802 = vadd.f32 0.0, %v801
        %v803 = vpop.f32.mrf.mxu0
        %804 = vdwg.mxu0
        %v805 = vadd.f32 %v292, %v679
        %v806 = vadd.f32 %v293, %v682
        %v807 = vadd.f32 %v294, %v687
        %v808 = vadd.f32 %v295, %v690
        %v809 = vadd.f32 %v296, %v695
        %v810 = vadd.f32 %v297, %v698
        %v811 = vadd.f32 %v298, %v703
        %v812 = vadd.f32 %v299, %v706
        %v813 = vadd.f32 %v300, %v711
        %v814 = vadd.f32 %v301, %v714
        %v815 = vadd.f32 %v302, %v719
        %v816 = vadd.f32 %v303, %v722
        %v817 = vadd.f32 %v304, %v727
        %v818 = vadd.f32 %v305, %v730
        %v819 = vadd.f32 %v306, %v735
        %v820 = vadd.f32 %v307, %v738
        %v821 = vadd.f32 %v308, %v743
        %v822 = vadd.f32 %v309, %v746
        %v823 = vadd.f32 %v310, %v751
        %v824 = vadd.f32 %v311, %v754
        %v825 = vadd.f32 %v312, %v759
        %v826 = vadd.f32 %v313, %v762
        %v827 = vadd.f32 %v314, %v767
        %v828 = vadd.f32 %v315, %v770
        %v829 = vadd.f32 %v316, %v775
        %v830 = vadd.f32 %v317, %v778
        %v831 = vadd.f32 %v318, %v783
        %v832 = vadd.f32 %v319, %v786
        %v833 = vadd.f32 %v320, %v791
        %v834 = vadd.f32 %v321, %v794
        %v835 = vadd.f32 %v322, %v799
        %v836 = vadd.f32 %v323, %v802
        %837 = vst [vmem:[#allocation2] sm:$0xff] %v805
        %838 = vst [vmem:[#allocation2 + $0x8] sm:$0xff] %v806
        %839 = vst [vmem:[#allocation2 + $0x10] sm:$0xff] %v807
        %840 = vst [vmem:[#allocation2 + $0x18] sm:$0xff] %v808
        %841 = vst [vmem:[#allocation2 + $0x20] sm:$0xff] %v809
        %842 = vst [vmem:[#allocation2 + $0x28] sm:$0xff] %v810
        %843 = vst [vmem:[#allocation2 + $0x30] sm:$0xff] %v811
        %844 = vst [vmem:[#allocation2 + $0x38] sm:$0xff] %v812
        %845 = vst [vmem:[#allocation2 + $0x40] sm:$0xff] %v813
        %846 = vst [vmem:[#allocation2 + $0x48] sm:$0xff] %v814
        %847 = vst [vmem:[#allocation2 + $0x50] sm:$0xff] %v815
        %848 = vst [vmem:[#allocation2 + $0x58] sm:$0xff] %v816
        %849 = vst [vmem:[#allocation2 + $0x60] sm:$0xff] %v817
        %850 = vst [vmem:[#allocation2 + $0x68] sm:$0xff] %v818
        %851 = vst [vmem:[#allocation2 + $0x70] sm:$0xff] %v819
        %852 = vst [vmem:[#allocation2 + $0x78] sm:$0xff] %v820
        %853 = vst [vmem:[#allocation2 + $0x80] sm:$0xff] %v821
        %854 = vst [vmem:[#allocation2 + $0x88] sm:$0xff] %v822
        %855 = vst [vmem:[#allocation2 + $0x90] sm:$0xff] %v823
        %856 = vst [vmem:[#allocation2 + $0x98] sm:$0xff] %v824
        %857 = vst [vmem:[#allocation2 + $0xa0] sm:$0xff] %v825
        %858 = vst [vmem:[#allocation2 + $0xa8] sm:$0xff] %v826
        %859 = vst [vmem:[#allocation2 + $0xb0] sm:$0xff] %v827
        %860 = vst [vmem:[#allocation2 + $0xb8] sm:$0xff] %v828
        %861 = vst [vmem:[#allocation2 + $0xc0] sm:$0xff] %v829
        %862 = vst [vmem:[#allocation2 + $0xc8] sm:$0xff] %v830
        %863 = vst [vmem:[#allocation2 + $0xd0] sm:$0xff] %v831
        %864 = vst [vmem:[#allocation2 + $0xd8] sm:$0xff] %v832
        %865 = vst [vmem:[#allocation2 + $0xe0] sm:$0xff] %v833
        %866 = vst [vmem:[#allocation2 + $0xe8] sm:$0xff] %v834
        %867 = vst [vmem:[#allocation2 + $0xf0] sm:$0xff] %v835
        %868 = vst [vmem:[#allocation2 + $0xf8] sm:$0xff] %v836
        // Predicated region
        $region45: #{tpu_custom_call.1} parent=27 // pred_check
          %p869 = pneg %p250
        $region46: #{tpu_custom_call.1} parent=27 // pred_check_branch
          %871 = sbr.rel (%p869) target = $region48
        $region47: #{tpu_custom_call.1} parent=27 // pred_region
          %v872 = vld [vmem:[#allocation2] sm:$0xff]
          %v873 = vld [vmem:[#allocation2 + $0x8] sm:$0xff]
          %v874 = vld [vmem:[#allocation2 + $0x10] sm:$0xff]
          %v875 = vld [vmem:[#allocation2 + $0x18] sm:$0xff]
          %v876 = vld [vmem:[#allocation2 + $0x20] sm:$0xff]
          %v877 = vld [vmem:[#allocation2 + $0x28] sm:$0xff]
          %v878 = vld [vmem:[#allocation2 + $0x30] sm:$0xff]
          %v879 = vld [vmem:[#allocation2 + $0x38] sm:$0xff]
          %v880 = vld [vmem:[#allocation2 + $0x40] sm:$0xff]
          %v881 = vld [vmem:[#allocation2 + $0x48] sm:$0xff]
          %v882 = vld [vmem:[#allocation2 + $0x50] sm:$0xff]
          %v883 = vld [vmem:[#allocation2 + $0x58] sm:$0xff]
          %v884 = vld [vmem:[#allocation2 + $0x60] sm:$0xff]
          %v885 = vld [vmem:[#allocation2 + $0x68] sm:$0xff]
          %v886 = vld [vmem:[#allocation2 + $0x70] sm:$0xff]
          %v887 = vld [vmem:[#allocation2 + $0x78] sm:$0xff]
          %v888 = vld [vmem:[#allocation2 + $0x80] sm:$0xff]
          %v889 = vld [vmem:[#allocation2 + $0x88] sm:$0xff]
          %v890 = vld [vmem:[#allocation2 + $0x90] sm:$0xff]
          %v891 = vld [vmem:[#allocation2 + $0x98] sm:$0xff]
          %v892 = vld [vmem:[#allocation2 + $0xa0] sm:$0xff]
          %v893 = vld [vmem:[#allocation2 + $0xa8] sm:$0xff]
          %v894 = vld [vmem:[#allocation2 + $0xb0] sm:$0xff]
          %v895 = vld [vmem:[#allocation2 + $0xb8] sm:$0xff]
          %v896 = vld [vmem:[#allocation2 + $0xc0] sm:$0xff]
          %v897 = vld [vmem:[#allocation2 + $0xc8] sm:$0xff]
          %v898 = vld [vmem:[#allocation2 + $0xd0] sm:$0xff]
          %v899 = vld [vmem:[#allocation2 + $0xd8] sm:$0xff]
          %v900 = vld [vmem:[#allocation2 + $0xe0] sm:$0xff]
          %v901 = vld [vmem:[#allocation2 + $0xe8] sm:$0xff]
          %v902 = vld [vmem:[#allocation2 + $0xf0] sm:$0xff]
          %v903 = vld [vmem:[#allocation2 + $0xf8] sm:$0xff]
          %904 = vst [vmem:[%s242] sm:$0xff] %v872
          %905 = vst [vmem:[%s242 + $0x8] sm:$0xff] %v873
          %906 = vst [vmem:[%s242 + $0x10] sm:$0xff] %v874
          %907 = vst [vmem:[%s242 + $0x18] sm:$0xff] %v875
          %908 = vst [vmem:[%s242 + $0x20] sm:$0xff] %v876
          %909 = vst [vmem:[%s242 + $0x28] sm:$0xff] %v877
          %910 = vst [vmem:[%s242 + $0x30] sm:$0xff] %v878
          %911 = vst [vmem:[%s242 + $0x38] sm:$0xff] %v879
          %912 = vst [vmem:[%s242 + $0x40] sm:$0xff] %v880
          %913 = vst [vmem:[%s242 + $0x48] sm:$0xff] %v881
          %914 = vst [vmem:[%s242 + $0x50] sm:$0xff] %v882
          %915 = vst [vmem:[%s242 + $0x58] sm:$0xff] %v883
          %916 = vst [vmem:[%s242 + $0x60] sm:$0xff] %v884
          %917 = vst [vmem:[%s242 + $0x68] sm:$0xff] %v885
          %918 = vst [vmem:[%s242 + $0x70] sm:$0xff] %v886
          %919 = vst [vmem:[%s242 + $0x78] sm:$0xff] %v887
          %920 = vst [vmem:[%s242 + $0x80] sm:$0xff] %v888
          %921 = vst [vmem:[%s242 + $0x88] sm:$0xff] %v889
          %922 = vst [vmem:[%s242 + $0x90] sm:$0xff] %v890
          %923 = vst [vmem:[%s242 + $0x98] sm:$0xff] %v891
          %924 = vst [vmem:[%s242 + $0xa0] sm:$0xff] %v892
          %925 = vst [vmem:[%s242 + $0xa8] sm:$0xff] %v893
          %926 = vst [vmem:[%s242 + $0xb0] sm:$0xff] %v894
          %927 = vst [vmem:[%s242 + $0xb8] sm:$0xff] %v895
          %928 = vst [vmem:[%s242 + $0xc0] sm:$0xff] %v896
          %929 = vst [vmem:[%s242 + $0xc8] sm:$0xff] %v897
          %930 = vst [vmem:[%s242 + $0xd0] sm:$0xff] %v898
          %931 = vst [vmem:[%s242 + $0xd8] sm:$0xff] %v899
          %932 = vst [vmem:[%s242 + $0xe0] sm:$0xff] %v900
          %933 = vst [vmem:[%s242 + $0xe8] sm:$0xff] %v901
          %934 = vst [vmem:[%s242 + $0xf0] sm:$0xff] %v902
          %935 = vst [vmem:[%s242 + $0xf8] sm:$0xff] %v903
          %v936 = vadd.f32 %v872, %v873
          %v937 = vadd.f32 %v936, %v874
          %v938 = vadd.f32 %v937, %v875
          %v939 = vadd.f32 %v938, %v876
          %v940 = vadd.f32 %v939, %v877
          %v941 = vadd.f32 %v940, %v878
          %v942 = vadd.f32 %v941, %v879
          %v943 = vadd.f32 %v942, %v880
          %v944 = vadd.f32 %v943, %v881
          %v945 = vadd.f32 %v944, %v882
          %v946 = vadd.f32 %v945, %v883
          %v947 = vadd.f32 %v946, %v884
          %v948 = vadd.f32 %v947, %v885
          %v949 = vadd.f32 %v948, %v886
          %v950 = vadd.f32 %v949, %v887
          %v951 = vadd.f32 %v950, %v888
          %v952 = vadd.f32 %v951, %v889
          %v953 = vadd.f32 %v952, %v890
          %v954 = vadd.f32 %v953, %v891
          %v955 = vadd.f32 %v954, %v892
          %v956 = vadd.f32 %v955, %v893
          %v957 = vadd.f32 %v956, %v894
          %v958 = vadd.f32 %v957, %v895
          %v959 = vadd.f32 %v958, %v896
          %v960 = vadd.f32 %v959, %v897
          %v961 = vadd.f32 %v960, %v898
          %v962 = vadd.f32 %v961, %v899
          %v963 = vadd.f32 %v962, %v900
          %v964 = vadd.f32 %v963, %v901
          %v965 = vadd.f32 %v964, %v902
          %v966 = vadd.f32 %v965, %v903
          %v967 = vrot.slane %v966, 4
          %v968 = vadd.f32 %v966, %v967
          %v969 = vrot.slane %v968, 2
          %v970 = vadd.f32 %v968, %v969
          %v971 = vrot.slane %v970, 1
          %v972 = vadd.f32 %v970, %v971
          %v973 = vmul.f32 %v872, %v872
          %v974 = vmul.f32 %v873, %v873
          %v975 = vmul.f32 %v874, %v874
          %v976 = vmul.f32 %v875, %v875
          %v977 = vmul.f32 %v876, %v876
          %v978 = vmul.f32 %v877, %v877
          %v979 = vmul.f32 %v878, %v878
          %v980 = vmul.f32 %v879, %v879
          %v981 = vmul.f32 %v880, %v880
          %v982 = vmul.f32 %v881, %v881
          %v983 = vmul.f32 %v882, %v882
          %v984 = vmul.f32 %v883, %v883
          %v985 = vmul.f32 %v884, %v884
          %v986 = vmul.f32 %v885, %v885
          %v987 = vmul.f32 %v886, %v886
          %v988 = vmul.f32 %v887, %v887
          %v989 = vmul.f32 %v888, %v888
          %v990 = vmul.f32 %v889, %v889
          %v991 = vmul.f32 %v890, %v890
          %v992 = vmul.f32 %v891, %v891
          %v993 = vmul.f32 %v892, %v892
          %v994 = vmul.f32 %v893, %v893
          %v995 = vmul.f32 %v894, %v894
          %v996 = vmul.f32 %v895, %v895
          %v997 = vmul.f32 %v896, %v896
          %v998 = vmul.f32 %v897, %v897
          %v999 = vmul.f32 %v898, %v898
          %v1000 = vmul.f32 %v899, %v899
          %v1001 = vmul.f32 %v900, %v900
          %v1002 = vmul.f32 %v901, %v901
          %v1003 = vmul.f32 %v902, %v902
          %v1004 = vmul.f32 %v903, %v903
          %v1005 = vadd.f32 %v973, %v974
          %v1006 = vadd.f32 %v1005, %v975
          %v1007 = vadd.f32 %v1006, %v976
          %v1008 = vadd.f32 %v1007, %v977
          %v1009 = vadd.f32 %v1008, %v978
          %v1010 = vadd.f32 %v1009, %v979
          %v1011 = vadd.f32 %v1010, %v980
          %v1012 = vadd.f32 %v1011, %v981
          %v1013 = vadd.f32 %v1012, %v982
          %v1014 = vadd.f32 %v1013, %v983
          %v1015 = vadd.f32 %v1014, %v984
          %v1016 = vadd.f32 %v1015, %v985
          %v1017 = vadd.f32 %v1016, %v986
          %v1018 = vadd.f32 %v1017, %v987
          %v1019 = vadd.f32 %v1018, %v988
          %v1020 = vadd.f32 %v1019, %v989
          %v1021 = vadd.f32 %v1020, %v990
          %v1022 = vadd.f32 %v1021, %v991
          %v1023 = vadd.f32 %v1022, %v992
          %v1024 = vadd.f32 %v1023, %v993
          %v1025 = vadd.f32 %v1024, %v994
          %v1026 = vadd.f32 %v1025, %v995
          %v1027 = vadd.f32 %v1026, %v996
          %v1028 = vadd.f32 %v1027, %v997
          %v1029 = vadd.f32 %v1028, %v998
          %v1030 = vadd.f32 %v1029, %v999
          %v1031 = vadd.f32 %v1030, %v1000
          %v1032 = vadd.f32 %v1031, %v1001
          %v1033 = vadd.f32 %v1032, %v1002
          %v1034 = vadd.f32 %v1033, %v1003
          %v1035 = vadd.f32 %v1034, %v1004
          %v1036 = vrot.slane %v1035, 4
          %v1037 = vadd.f32 %v1035, %v1036
          %v1038 = vrot.slane %v1037, 2
          %v1039 = vadd.f32 %v1037, %v1038
          %v1040 = vrot.slane %v1039, 1
          %v1041 = vadd.f32 %v1039, %v1040
          %vm1042 = vcmask 1040384
          %v1043 = vsel %vm1042, %v972, %v1041
          %vm1044 = vcmask 1041408
          %v1045 = vsel %vm1044, %v1043, 0.0
          %v1046 = vld [vmem:[#allocation9] sm:$0xff]
          %v1047 = vadd.f32 %v1046, %v1045
          %1048 = vst [vmem:[#allocation9] sm:$0xff] %v1047
        $region48: #{tpu_custom_call.1} parent=27 // pred_fallthru
          _
        %s1049 = sand.u32 %s108, 1
        %s1050 = scalar_lea.sflag [#allocation5], %s1049
        %s1051 = sand.u32 %s108, 1
        %s1052 = smul.addr %s1051, 256
        %s1053 = scalar_lea.vmem [#allocation8], %s1052
        // Predicated region
        $region49: #{tpu_custom_call.1} parent=27 // pred_check
          %p1054 = pneg %p118
        $region50: #{tpu_custom_call.1} parent=27 // pred_check_branch
          %1056 = sbr.rel (%p1054) target = $region52
        $region51: #{tpu_custom_call.1} parent=27 // pred_region
          %s1057 = smul.u32 32, %s29
          %s1059 = ssub.s32 4096, 4096
          %1060 = vsyncadd %s1050, %s1059
          %s1061 = sadd.s32 %s28, %s1057
          %s1062 = smul.addr %s1061, 128
          %s1063 = scalar_lea.hbm %s2, %s1062
          %s1064 = sshll.u32 %s1053, 4
          %s1065 = int_to_ptr.vmem [resolvable:$true] %s1064
          %1070 = dma.vmem_to_hbm [thread:$0]  %s1065, 4096, %s1063, %s1050, 128, 128, 8
        $region52: #{tpu_custom_call.1} parent=27 // pred_fallthru
          _
        // Predicated region
        $region53: #{tpu_custom_call.1} parent=27 // pred_check
          %p1071 = pneg %p144
        $region54: #{tpu_custom_call.1} parent=27 // pred_check_branch
          %1073 = sbr.rel (%p1071) target = $region56
        $region55: #{tpu_custom_call.1} parent=27 // pred_region
          %s1075 = ssub.s32 128, 128
          %1076 = vsyncadd [#allocation10], %s1075
          %s1077 = smul.addr %s28, 128
          %s1078 = scalar_lea.hbm %s3, %s1077
          %s1080 = sshll.u32 [#allocation9], 4
          %s1081 = int_to_ptr.vmem [resolvable:$true] %s1080
          %1083 = dma.vmem_to_hbm [thread:$0]  %s1081, 128, %s1078, [#allocation10]
        $region56: #{tpu_custom_call.1} parent=27 // pred_fallthru
          _
        // Predicated region
        $region57: #{tpu_custom_call.1} parent=27 // pred_check
          %p1084 = pneg %p144
        $region58: #{tpu_custom_call.1} parent=27 // pred_check_branch
          %1086 = sbr.rel (%p1084) target = $region60
        $region59: #{tpu_custom_call.1} parent=27 // pred_region
          %1087 = dma.done [#allocation10], 128
        $region60: #{tpu_custom_call.1} parent=27 // pred_fallthru
          _
      $region28: #{tpu_custom_call.1} parent=5 // pred_fallthru
        _
      %p1088 = scmp.le.s32.totalorder 2, %s18
      // Predicated region
      $region61: #{tpu_custom_call.1} parent=5 // pred_check
        %p1089 = pneg %p1088
      $region62: #{tpu_custom_call.1} parent=5 // pred_check_branch
        %1091 = sbr.rel (%p1089) target = $region64
      $region63: #{tpu_custom_call.1} parent=5 // pred_region
        %s1092 = ssub.s32 %s18, 2
        // Predicated region
        $region65: #{tpu_custom_call.1} parent=63 // pred_check
          %p1093 = pneg %p124
        $region66: #{tpu_custom_call.1} parent=63 // pred_check_branch
          %1095 = sbr.rel (%p1093) target = $region68
        $region67: #{tpu_custom_call.1} parent=63 // pred_region
          %s1096 = sand.u32 %s109, 1
          %s1097 = scalar_lea.sflag [#allocation5], %s1096
          %s1098 = sand.u32 %s109, 1
          %s1099 = smul.addr %s1098, 256
          %s1100 = scalar_lea.vmem [#allocation8], %s1099
          %1101 = dma.done %s1097, 4096
        $region68: #{tpu_custom_call.1} parent=63 // pred_fallthru
          _
      $region64: #{tpu_custom_call.1} parent=5 // pred_fallthru
        _
    $region6: #{tpu_custom_call.1} parent=1 // loop_footer
      %s22 = sadd.s32 1, %s18
    $region7: #{tpu_custom_call.1} parent=1 // loop_footer_branch
      %17 = sbr.rel target = $region3
    $region8: #{tpu_custom_call.1} parent=1 // loop_exit
      _
    %1102 = vsyncpa [#allocation4], 1
    %s1103 = scalar_lea.sflag [#allocation4], 1
    %1104 = vsyncpa %s1103, 1
    %1105 = vsyncpa [#allocation7], 1
    %1106 = vsyncpa [#allocation5], 1
    %s1107 = scalar_lea.sflag [#allocation5], 1
    %1108 = vsyncpa %s1107, 1
    %1109 = vsyncpa [#allocation10], 1

</llo_original>
